<compile_context>
chip_gen: v6e
topology: v6e:2x2x1
jax: 0.10.0
libtpu: 0.0.40
codegen_flags: <defaults>
</compile_context>

<pallas_src>
import functools

import numpy as np

import jax
import jax.numpy as jnp
from jax.experimental import pallas as pl
from jax.experimental.pallas import tpu as pltpu


# ---------------------------------------------------------------------------
# Fused ConcatNet kernel (Bt batch images per grid step, all lanes live)
# ---------------------------------------------------------------------------
def _concatnet_kernel(x_ref, mask_ref, w1_ref, w2_ref, w3_ref, b_ref,
                      scale_ref, out_ref, *, c_in, ch, W, blk):
    """Lane-dense, batch-folded layout: activations are (channels, Bt*H*W).

    x_ref    : (c_in, blk)            input block (Bt images, lane = pixel)
    mask_ref : (9, blk)               0/1 in-bounds mask per 3x3 tap
    w1_ref   : (2*ch, 9*c_in)         fused first 3x3 conv (net1 | net2)
    w2_ref   : (2*ch, 2*ch)           block-diagonal 1x1 conv
    w3_ref   : (9*2*c_in, 2*ch)       block-diagonal last 3x3 conv, tap-stacked rows
    b_ref    : (2*ch+2*ch+2*c_in, 1)  packed biases [B1 | B2 | B3]
    scale_ref: (1,)  SMEM             SplitAndNorm.scale
    out_ref  : (2*c_in, blk)          rows [:c_in]=tanh(net1)*scale, [c_in:]=net2
    """
    # Tap order matches the fused weight layout: (dy, dx) row-major over 3x3.
    shifts = [dy * W + dx for dy in (-1, 0, 1) for dx in (-1, 0, 1)]

    def tap(a, i):
        # a[c, p] -> a[c, p + shifts[i]], zeroed where the source pixel falls
        # outside its own image (mask also kills cross-image / flat wrap, so the
        # circular roll over the batch-folded lane axis is exact).
        off = shifts[i]
        if off == 0:
            return a
        return pltpu.roll(a, shift=(-off) % blk, axis=1) * mask_ref[i:i + 1, :]

    c2 = 2 * ch
    co = 2 * c_in
    b1 = b_ref[0:c2, :]
    b2 = b_ref[c2:2 * c2, :]
    b3 = b_ref[2 * c2:2 * c2 + co, :]

    # --- layer 1: fused 3x3 conv (c_in -> 2*ch) + ReLU -----------------------
    # im2col operand built in vregs (9 x (c_in, blk)); no VMEM scratch.
    x = x_ref[...]
    im = jnp.concatenate([tap(x, i) for i in range(9)], axis=0)   # (9*c_in, blk)
    h = jnp.dot(w1_ref[...], im, preferred_element_type=jnp.float32) + b1
    h = jnp.maximum(h, 0.0)                                       # (2*ch, blk)

    # --- layer 2: block-diagonal 1x1 conv + ReLU ------------------------------
    h = jnp.dot(w2_ref[...], h, preferred_element_type=jnp.float32) + b2
    h = jnp.maximum(h, 0.0)                                       # (2*ch, blk)

    # --- layer 3: ONE stacked GEMM, taps applied on the output side ----------
    z = jnp.dot(w3_ref[...], h, preferred_element_type=jnp.float32)  # (9*co, blk)
    acc = jnp.zeros((co, blk), jnp.float32)
    for i in range(9):                       # 8-row slices: sublane-aligned, free
        acc = acc + tap(z[i * co:(i + 1) * co, :], i)
    y = acc + b3                                                   # (2*c_in, blk)

    # --- SplitAndNorm fused into one full 8-row unmasked store ----------------
    row = jax.lax.broadcasted_iota(jnp.int32, (co, blk), 0)
    out_ref[...] = jnp.where(row < c_in, jnp.tanh(y) * scale_ref[0], y)


# ---------------------------------------------------------------------------
# Wrapper
# ---------------------------------------------------------------------------
def _make_tap_masks(H, W):
    """0/1 mask per 3x3 tap marking in-bounds source pixels (flattened H*W)."""
    yy, xx = np.mgrid[0:H, 0:W]
    rows = []
    for dy in (-1, 0, 1):
        for dx in (-1, 0, 1):
            ok = ((yy + dy >= 0) & (yy + dy < H) &
                  (xx + dx >= 0) & (xx + dx < W))
            rows.append(ok.reshape(-1).astype(np.float32))
    return np.stack(rows, axis=0)                                  # (9, H*W)


@jax.jit
def concat_net_forward(x_nchw, fused):
    """x_nchw: (N, C_in, H, W)  ->  (s, t), each (N, C_in, H, W) like the module."""
    N, C, H, W = x_nchw.shape
    HW = H * W
    C2 = fused["W2"].shape[0]                                      # 2 * hidden channels
    CH = C2 // 2

    # Batch fold: each grid step processes Bt images as one block of Bt*HW lanes.
    # Keep >= 2 grid steps when N >= 2 (v7x has two TensorCores; a 1-step grid
    # would idle one of them) and cap Bt so the per-step working set stays far
    # below even v5e's 16 MiB default scoped-VMEM budget.
    BT_MAX = 32
    if N == 1:
        G = 1
    else:
        G = 2
        while N % G != 0 or N // G > BT_MAX:
            G += 1
    Bt = N // G
    blk = Bt * HW

    # Lane-dense, batch-folded activations: (C, N*HW).
    x = jnp.transpose(x_nchw.reshape(N, C, HW).astype(jnp.float32),
                      (1, 0, 2)).reshape(C, N * HW)
    masks = jnp.asarray(np.tile(_make_tap_masks(H, W), (1, Bt)))   # (9, blk) constant

    kernel = functools.partial(_concatnet_kernel, c_in=C, ch=CH, W=W, blk=blk)
    y = pl.pallas_call(
        kernel,
        out_shape=jax.ShapeDtypeStruct((2 * C, N * HW), jnp.float32),
        grid=(G,),
        in_specs=[
            pl.BlockSpec((C, blk), lambda g: (0, g)),              # x block
            pl.BlockSpec((9, blk), lambda g: (0, 0)),              # tap masks
            pl.BlockSpec((C2, 9 * C), lambda g: (0, 0)),           # W1 (fused)
            pl.BlockSpec((C2, C2), lambda g: (0, 0)),              # W2 (block-diag)
            pl.BlockSpec((9 * 2 * C, C2), lambda g: (0, 0)),       # W3 (tap-stacked)
            pl.BlockSpec((2 * C2 + 2 * C, 1), lambda g: (0, 0)),   # packed biases
            pl.BlockSpec(memory_space=pltpu.MemorySpace.SMEM),     # scale (scalar)
        ],
        out_specs=pl.BlockSpec((2 * C, blk), lambda g: (0, g)),
        compiler_params=pltpu.CompilerParams(
            dimension_semantics=("parallel",)),
    )(x, masks, fused["W1"], fused["W2"], fused["W3"], fused["B"],
      fused["scale"])

    # Free relayout back to NCHW; split into (s, t) is a free slice.
    y = y.reshape(2 * C, N, HW).transpose(1, 0, 2).reshape(N, 2 * C, H, W)
    return y[:, :C], y[:, C:]


# ---------------------------------------------------------------------------
# Parameters: per-subnet conv weights + fused / matmul-ready kernel weights
# ---------------------------------------------------------------------------
def init_params(key, in_channels, channels):
    """Per-subnet params: 3x3 convs as HWIO, 1x1 conv as (Cin, Cout)."""
    def conv_p(k, kh, kw, cin, cout):
        kw_key, kb_key = jax.random.split(k)
        w = jax.random.normal(kw_key, (kh, kw, cin, cout), jnp.float32) * 0.1
        b = jax.random.normal(kb_key, (cout,), jnp.float32) * 0.01
        return w, b

    ks = jax.random.split(key, 6)

    def subnet(k1, k2, k3):
        w1, b1 = conv_p(k1, 3, 3, in_channels, channels)
        w2, b2 = conv_p(k2, 1, 1, channels, channels)
        w3, b3 = conv_p(k3, 3, 3, channels, in_channels)
        return (w1, b1, w2[0, 0], b2, w3, b3)

    return {"net1": subnet(ks[0], ks[1], ks[2]),
            "net2": subnet(ks[3], ks[4], ks[5]),
            "scale": jnp.ones((1,), jnp.float32)}                  # SplitAndNorm.scale


def fuse_params(params):
    """Build the fused / block-diagonal matmul-ready weights used by the kernel."""
    w1a, b1a, w2a, b2a, w3a, b3a = params["net1"]
    w1b, b1b, w2b, b2b, w3b, b3b = params["net2"]
    c_in, ch = w1a.shape[2], w1a.shape[3]

    def mat3x3(w_hwio):     # (3,3,Cin,Cout) -> (Cout, 9*Cin), tap-major / cin-minor
        return jnp.transpose(w_hwio, (3, 0, 1, 2)).reshape(w_hwio.shape[3], -1)

    W1 = jnp.concatenate([mat3x3(w1a), mat3x3(w1b)], axis=0)               # (2CH, 9*Cin)
    B1 = jnp.concatenate([b1a, b1b]).reshape(-1, 1)

    z = jnp.zeros((ch, ch), jnp.float32)
    W2 = jnp.concatenate([jnp.concatenate([w2a.T, z], axis=1),
                          jnp.concatenate([z, w2b.T], axis=1)], axis=0)    # (2CH, 2CH)
    B2 = jnp.concatenate([b2a, b2b]).reshape(-1, 1)

    m3a = jnp.transpose(w3a, (3, 0, 1, 2))                                 # (Cin,3,3,CH)
    m3b = jnp.transpose(w3b, (3, 0, 1, 2))
    z3 = jnp.zeros_like(m3a)
    full3 = jnp.concatenate([jnp.concatenate([m3a, z3], axis=3),
                             jnp.concatenate([z3, m3b], axis=3)], axis=0)  # (2Cin,3,3,2CH)
    # Tap-stacked rows for the single layer-3 GEMM: row index = tap*2Cin + cout.
    W3 = jnp.transpose(full3, (1, 2, 0, 3)).reshape(9 * 2 * c_in, 2 * ch)  # (72, 2CH)
    B3 = jnp.concatenate([b3a, b3b]).reshape(-1, 1)

    return {"W1": W1, "W2": W2, "W3": W3,
            "B": jnp.concatenate([B1, B2, B3], axis=0),                    # packed biases
            "scale": params["scale"]}


# ---------------------------------------------------------------------------
# Pure-JAX reference (lax conv) for correctness check
# ---------------------------------------------------------------------------
def reference_forward(x_nchw, params):
    def conv3(x, w, b):
        y = jax.lax.conv_general_dilated(
            x, w, window_strides=(1, 1), padding="SAME",
            dimension_numbers=("NCHW", "HWIO", "NCHW"),
            precision=jax.lax.Precision.HIGHEST)
        return y + b.reshape(1, -1, 1, 1)

    def subnet(x, p):
        w1, b1, w2, b2, w3, b3 = p
        h = jax.nn.relu(conv3(x, w1, b1))
        h = jax.nn.relu(jnp.einsum("nchw,cd->ndhw", h, w2,
                                   precision=jax.lax.Precision.HIGHEST)
                        + b2.reshape(1, -1, 1, 1))
        return conv3(h, w3, b3)

    x = x_nchw.astype(jnp.float32)
    y1 = subnet(x, params["net1"])
    y2 = subnet(x, params["net2"])
    return jnp.tanh(y1) * params["scale"][0], y2


# ---------------------------------------------------------------------------
if __name__ == "__main__":
    B, C_IN, CH, SP = 2, 4, 32, 16

    key = jax.random.PRNGKey(0)
    k_params, k_x = jax.random.split(key)
    params = init_params(k_params, C_IN, CH)
    fused = fuse_params(params)
    x = jax.random.normal(k_x, (B, C_IN, SP, SP), jnp.float32)     # NCHW like PyTorch

    s, t = concat_net_forward(x, fused)
    s = jax.block_until_ready(s)
    t = jax.block_until_ready(t)

    # sanity check against pure-JAX reference
    s_ref, t_ref = reference_forward(x, params)
    assert s.shape == (B, C_IN, SP, SP) and t.shape == (B, C_IN, SP, SP)
    assert jnp.allclose(s, s_ref, atol=1e-3, rtol=1e-3), \
        float(jnp.max(jnp.abs(s - s_ref)))
    assert jnp.allclose(t, t_ref, atol=1e-3, rtol=1e-3), \
        float(jnp.max(jnp.abs(t - t_ref)))

    print("KERNEL_OK")
</pallas_src>

<mosaic_0001>
module attributes {stable_mosaic.version = 11 : i64} {
  func.func @_concatnet_kernel(%arg0: i32, %arg1: memref<4x256xf32, #tpu.memory_space<vmem>>, %arg2: memref<9x256xf32, #tpu.memory_space<vmem>>, %arg3: memref<64x36xf32, #tpu.memory_space<vmem>>, %arg4: memref<64x64xf32, #tpu.memory_space<vmem>>, %arg5: memref<72x64xf32, #tpu.memory_space<vmem>>, %arg6: memref<136x1xf32, #tpu.memory_space<vmem>>, %arg7: memref<1xf32, #tpu.memory_space<smem>>, %arg8: memref<8x256xf32, #tpu.memory_space<vmem>>) attributes {dimension_semantics = [#tpu.dimension_semantics<parallel>], iteration_bounds = array<i64: 2>, scalar_prefetch = 0 : i64, scratch_operands = 0 : i64, tpu.core_type = #tpu.core_type<tc>, window_params = [{transform_indices = @transform_0, window_bounds = array<i64: 4, 256>}, {pipeline_mode = #tpu.pipeline_mode<synchronous>, transform_indices = @transform_1, window_bounds = array<i64: 9, 256>}, {pipeline_mode = #tpu.pipeline_mode<synchronous>, transform_indices = @transform_2, window_bounds = array<i64: 64, 36>}, {pipeline_mode = #tpu.pipeline_mode<synchronous>, transform_indices = @transform_3, window_bounds = array<i64: 64, 64>}, {pipeline_mode = #tpu.pipeline_mode<synchronous>, transform_indices = @transform_4, window_bounds = array<i64: 72, 64>}, {pipeline_mode = #tpu.pipeline_mode<synchronous>, transform_indices = @transform_5, window_bounds = array<i64: 136, 1>}, {transform_indices = @transform_6, window_bounds = array<i64: 1>}, {transform_indices = @transform_7, window_bounds = array<i64: 8, 256>}]} {
    %c0 = arith.constant 0 : index
    %c0_0 = arith.constant 0 : index
    %0 = vector.load %arg6[%c0, %c0_0] : memref<136x1xf32, #tpu.memory_space<vmem>>, vector<64x1xf32>
    %c64 = arith.constant 64 : index
    %c0_1 = arith.constant 0 : index
    %1 = vector.load %arg6[%c64, %c0_1] : memref<136x1xf32, #tpu.memory_space<vmem>>, vector<64x1xf32>
    %c128 = arith.constant 128 : index
    %c0_2 = arith.constant 0 : index
    %2 = vector.load %arg6[%c128, %c0_2] : memref<136x1xf32, #tpu.memory_space<vmem>>, vector<8x1xf32>
    %c0_3 = arith.constant 0 : index
    %c0_4 = arith.constant 0 : index
    %3 = vector.load %arg1[%c0_3, %c0_4] : memref<4x256xf32, #tpu.memory_space<vmem>>, vector<4x256xf32>
    %c17_i32 = arith.constant 17 : i32
    %4 = tpu.dynamic_rotate %3 by %c17_i32 dim 1 : vector<4x256xf32>, i32 -> vector<4x256xf32>
    %c0_5 = arith.constant 0 : index
    %c0_6 = arith.constant 0 : index
    %5 = vector.load %arg2[%c0_5, %c0_6] : memref<9x256xf32, #tpu.memory_space<vmem>>, vector<1x256xf32>
    %6 = vector.broadcast %5 : vector<1x256xf32> to vector<4x256xf32>
    %7 = arith.mulf %4, %6 : vector<4x256xf32>
    %c16_i32 = arith.constant 16 : i32
    %8 = tpu.dynamic_rotate %3 by %c16_i32 dim 1 : vector<4x256xf32>, i32 -> vector<4x256xf32>
    %c1 = arith.constant 1 : index
    %c0_7 = arith.constant 0 : index
    %9 = vector.load %arg2[%c1, %c0_7] : memref<9x256xf32, #tpu.memory_space<vmem>>, vector<1x256xf32>
    %10 = vector.broadcast %9 : vector<1x256xf32> to vector<4x256xf32>
    %11 = arith.mulf %8, %10 : vector<4x256xf32>
    %c15_i32 = arith.constant 15 : i32
    %12 = tpu.dynamic_rotate %3 by %c15_i32 dim 1 : vector<4x256xf32>, i32 -> vector<4x256xf32>
    %c2 = arith.constant 2 : index
    %c0_8 = arith.constant 0 : index
    %13 = vector.load %arg2[%c2, %c0_8] : memref<9x256xf32, #tpu.memory_space<vmem>>, vector<1x256xf32>
    %14 = vector.broadcast %13 : vector<1x256xf32> to vector<4x256xf32>
    %15 = arith.mulf %12, %14 : vector<4x256xf32>
    %c1_i32 = arith.constant 1 : i32
    %16 = tpu.dynamic_rotate %3 by %c1_i32 dim 1 : vector<4x256xf32>, i32 -> vector<4x256xf32>
    %c3 = arith.constant 3 : index
    %c0_9 = arith.constant 0 : index
    %17 = vector.load %arg2[%c3, %c0_9] : memref<9x256xf32, #tpu.memory_space<vmem>>, vector<1x256xf32>
    %18 = vector.broadcast %17 : vector<1x256xf32> to vector<4x256xf32>
    %19 = arith.mulf %16, %18 : vector<4x256xf32>
    %c255_i32 = arith.constant 255 : i32
    %20 = tpu.dynamic_rotate %3 by %c255_i32 dim 1 : vector<4x256xf32>, i32 -> vector<4x256xf32>
    %c5 = arith.constant 5 : index
    %c0_10 = arith.constant 0 : index
    %21 = vector.load %arg2[%c5, %c0_10] : memref<9x256xf32, #tpu.memory_space<vmem>>, vector<1x256xf32>
    %22 = vector.broadcast %21 : vector<1x256xf32> to vector<4x256xf32>
    %23 = arith.mulf %20, %22 : vector<4x256xf32>
    %c241_i32 = arith.constant 241 : i32
    %24 = tpu.dynamic_rotate %3 by %c241_i32 dim 1 : vector<4x256xf32>, i32 -> vector<4x256xf32>
    %c6 = arith.constant 6 : index
    %c0_11 = arith.constant 0 : index
    %25 = vector.load %arg2[%c6, %c0_11] : memref<9x256xf32, #tpu.memory_space<vmem>>, vector<1x256xf32>
    %26 = vector.broadcast %25 : vector<1x256xf32> to vector<4x256xf32>
    %27 = arith.mulf %24, %26 : vector<4x256xf32>
    %c240_i32 = arith.constant 240 : i32
    %28 = tpu.dynamic_rotate %3 by %c240_i32 dim 1 : vector<4x256xf32>, i32 -> vector<4x256xf32>
    %c7 = arith.constant 7 : index
    %c0_12 = arith.constant 0 : index
    %29 = vector.load %arg2[%c7, %c0_12] : memref<9x256xf32, #tpu.memory_space<vmem>>, vector<1x256xf32>
    %30 = vector.broadcast %29 : vector<1x256xf32> to vector<4x256xf32>
    %31 = arith.mulf %28, %30 : vector<4x256xf32>
    %c239_i32 = arith.constant 239 : i32
    %32 = tpu.dynamic_rotate %3 by %c239_i32 dim 1 : vector<4x256xf32>, i32 -> vector<4x256xf32>
    %c8 = arith.constant 8 : index
    %c0_13 = arith.constant 0 : index
    %33 = vector.load %arg2[%c8, %c0_13] : memref<9x256xf32, #tpu.memory_space<vmem>>, vector<1x256xf32>
    %34 = vector.broadcast %33 : vector<1x256xf32> to vector<4x256xf32>
    %35 = arith.mulf %32, %34 : vector<4x256xf32>
    %36 = tpu.concatenate %7, %11, %15, %19, %3, %23, %27, %31, %35 in 0 : vector<4x256xf32>, vector<4x256xf32>, vector<4x256xf32>, vector<4x256xf32>, vector<4x256xf32>, vector<4x256xf32>, vector<4x256xf32>, vector<4x256xf32>, vector<4x256xf32> -> vector<36x256xf32>
    %c0_14 = arith.constant 0 : index
    %c0_15 = arith.constant 0 : index
    %37 = vector.load %arg3[%c0_14, %c0_15] : memref<64x36xf32, #tpu.memory_space<vmem>>, vector<64x36xf32>
    %cst = arith.constant dense<0.000000e+00> : vector<64x256xf32>
    %38 = tpu.matmul %37, %36, %cst {dimension_numbers = #tpu.dot_dimension_numbers<[1], [0], [0], [1], [0, 0, 1, 1], [], []>} : vector<64x36xf32>, vector<36x256xf32>, vector<64x256xf32> -> vector<64x256xf32>
    %39 = vector.broadcast %0 : vector<64x1xf32> to vector<64x256xf32>
    %40 = arith.addf %38, %39 : vector<64x256xf32>
    %cst_16 = arith.constant 0.000000e+00 : f32
    %41 = vector.broadcast %cst_16 : f32 to vector<64x256xf32>
    %42 = arith.maximumf %40, %41 : vector<64x256xf32>
    %c0_17 = arith.constant 0 : index
    %c0_18 = arith.constant 0 : index
    %43 = vector.load %arg4[%c0_17, %c0_18] : memref<64x64xf32, #tpu.memory_space<vmem>>, vector<64x64xf32>
    %cst_19 = arith.constant dense<0.000000e+00> : vector<64x256xf32>
    %44 = tpu.matmul %43, %42, %cst_19 {dimension_numbers = #tpu.dot_dimension_numbers<[1], [0], [0], [1], [0, 0, 1, 1], [], []>} : vector<64x64xf32>, vector<64x256xf32>, vector<64x256xf32> -> vector<64x256xf32>
    %45 = vector.broadcast %1 : vector<64x1xf32> to vector<64x256xf32>
    %46 = arith.addf %44, %45 : vector<64x256xf32>
    %cst_20 = arith.constant 0.000000e+00 : f32
    %47 = vector.broadcast %cst_20 : f32 to vector<64x256xf32>
    %48 = arith.maximumf %46, %47 : vector<64x256xf32>
    %c0_21 = arith.constant 0 : index
    %c0_22 = arith.constant 0 : index
    %49 = vector.load %arg5[%c0_21, %c0_22] : memref<72x64xf32, #tpu.memory_space<vmem>>, vector<72x64xf32>
    %cst_23 = arith.constant dense<0.000000e+00> : vector<72x256xf32>
    %50 = tpu.matmul %49, %48, %cst_23 {dimension_numbers = #tpu.dot_dimension_numbers<[1], [0], [0], [1], [0, 0, 1, 1], [], []>} : vector<72x64xf32>, vector<64x256xf32>, vector<72x256xf32> -> vector<72x256xf32>
    %cst_24 = arith.constant 0.000000e+00 : f32
    %51 = vector.broadcast %cst_24 : f32 to vector<8x256xf32>
    %52 = vector.extract_strided_slice %50 {offsets = [0, 0], sizes = [8, 256], strides = [1, 1]} : vector<72x256xf32> to vector<8x256xf32>
    %c17_i32_25 = arith.constant 17 : i32
    %53 = tpu.dynamic_rotate %52 by %c17_i32_25 dim 1 : vector<8x256xf32>, i32 -> vector<8x256xf32>
    %c0_26 = arith.constant 0 : index
    %c0_27 = arith.constant 0 : index
    %54 = vector.load %arg2[%c0_26, %c0_27] : memref<9x256xf32, #tpu.memory_space<vmem>>, vector<1x256xf32>
    %55 = vector.broadcast %54 : vector<1x256xf32> to vector<8x256xf32>
    %56 = arith.mulf %53, %55 : vector<8x256xf32>
    %57 = arith.addf %51, %56 : vector<8x256xf32>
    %58 = vector.extract_strided_slice %50 {offsets = [8, 0], sizes = [8, 256], strides = [1, 1]} : vector<72x256xf32> to vector<8x256xf32>
    %c16_i32_28 = arith.constant 16 : i32
    %59 = tpu.dynamic_rotate %58 by %c16_i32_28 dim 1 : vector<8x256xf32>, i32 -> vector<8x256xf32>
    %c1_29 = arith.constant 1 : index
    %c0_30 = arith.constant 0 : index
    %60 = vector.load %arg2[%c1_29, %c0_30] : memref<9x256xf32, #tpu.memory_space<vmem>>, vector<1x256xf32>
    %61 = vector.broadcast %60 : vector<1x256xf32> to vector<8x256xf32>
    %62 = arith.mulf %59, %61 : vector<8x256xf32>
    %63 = arith.addf %57, %62 : vector<8x256xf32>
    %64 = vector.extract_strided_slice %50 {offsets = [16, 0], sizes = [8, 256], strides = [1, 1]} : vector<72x256xf32> to vector<8x256xf32>
    %c15_i32_31 = arith.constant 15 : i32
    %65 = tpu.dynamic_rotate %64 by %c15_i32_31 dim 1 : vector<8x256xf32>, i32 -> vector<8x256xf32>
    %c2_32 = arith.constant 2 : index
    %c0_33 = arith.constant 0 : index
    %66 = vector.load %arg2[%c2_32, %c0_33] : memref<9x256xf32, #tpu.memory_space<vmem>>, vector<1x256xf32>
    %67 = vector.broadcast %66 : vector<1x256xf32> to vector<8x256xf32>
    %68 = arith.mulf %65, %67 : vector<8x256xf32>
    %69 = arith.addf %63, %68 : vector<8x256xf32>
    %70 = vector.extract_strided_slice %50 {offsets = [24, 0], sizes = [8, 256], strides = [1, 1]} : vector<72x256xf32> to vector<8x256xf32>
    %c1_i32_34 = arith.constant 1 : i32
    %71 = tpu.dynamic_rotate %70 by %c1_i32_34 dim 1 : vector<8x256xf32>, i32 -> vector<8x256xf32>
    %c3_35 = arith.constant 3 : index
    %c0_36 = arith.constant 0 : index
    %72 = vector.load %arg2[%c3_35, %c0_36] : memref<9x256xf32, #tpu.memory_space<vmem>>, vector<1x256xf32>
    %73 = vector.broadcast %72 : vector<1x256xf32> to vector<8x256xf32>
    %74 = arith.mulf %71, %73 : vector<8x256xf32>
    %75 = arith.addf %69, %74 : vector<8x256xf32>
    %76 = vector.extract_strided_slice %50 {offsets = [32, 0], sizes = [8, 256], strides = [1, 1]} : vector<72x256xf32> to vector<8x256xf32>
    %77 = arith.addf %75, %76 : vector<8x256xf32>
    %78 = vector.extract_strided_slice %50 {offsets = [40, 0], sizes = [8, 256], strides = [1, 1]} : vector<72x256xf32> to vector<8x256xf32>
    %c255_i32_37 = arith.constant 255 : i32
    %79 = tpu.dynamic_rotate %78 by %c255_i32_37 dim 1 : vector<8x256xf32>, i32 -> vector<8x256xf32>
    %c5_38 = arith.constant 5 : index
    %c0_39 = arith.constant 0 : index
    %80 = vector.load %arg2[%c5_38, %c0_39] : memref<9x256xf32, #tpu.memory_space<vmem>>, vector<1x256xf32>
    %81 = vector.broadcast %80 : vector<1x256xf32> to vector<8x256xf32>
    %82 = arith.mulf %79, %81 : vector<8x256xf32>
    %83 = arith.addf %77, %82 : vector<8x256xf32>
    %84 = vector.extract_strided_slice %50 {offsets = [48, 0], sizes = [8, 256], strides = [1, 1]} : vector<72x256xf32> to vector<8x256xf32>
    %c241_i32_40 = arith.constant 241 : i32
    %85 = tpu.dynamic_rotate %84 by %c241_i32_40 dim 1 : vector<8x256xf32>, i32 -> vector<8x256xf32>
    %c6_41 = arith.constant 6 : index
    %c0_42 = arith.constant 0 : index
    %86 = vector.load %arg2[%c6_41, %c0_42] : memref<9x256xf32, #tpu.memory_space<vmem>>, vector<1x256xf32>
    %87 = vector.broadcast %86 : vector<1x256xf32> to vector<8x256xf32>
    %88 = arith.mulf %85, %87 : vector<8x256xf32>
    %89 = arith.addf %83, %88 : vector<8x256xf32>
    %90 = vector.extract_strided_slice %50 {offsets = [56, 0], sizes = [8, 256], strides = [1, 1]} : vector<72x256xf32> to vector<8x256xf32>
    %c240_i32_43 = arith.constant 240 : i32
    %91 = tpu.dynamic_rotate %90 by %c240_i32_43 dim 1 : vector<8x256xf32>, i32 -> vector<8x256xf32>
    %c7_44 = arith.constant 7 : index
    %c0_45 = arith.constant 0 : index
    %92 = vector.load %arg2[%c7_44, %c0_45] : memref<9x256xf32, #tpu.memory_space<vmem>>, vector<1x256xf32>
    %93 = vector.broadcast %92 : vector<1x256xf32> to vector<8x256xf32>
    %94 = arith.mulf %91, %93 : vector<8x256xf32>
    %95 = arith.addf %89, %94 : vector<8x256xf32>
    %96 = vector.extract_strided_slice %50 {offsets = [64, 0], sizes = [8, 256], strides = [1, 1]} : vector<72x256xf32> to vector<8x256xf32>
    %c239_i32_46 = arith.constant 239 : i32
    %97 = tpu.dynamic_rotate %96 by %c239_i32_46 dim 1 : vector<8x256xf32>, i32 -> vector<8x256xf32>
    %c8_47 = arith.constant 8 : index
    %c0_48 = arith.constant 0 : index
    %98 = vector.load %arg2[%c8_47, %c0_48] : memref<9x256xf32, #tpu.memory_space<vmem>>, vector<1x256xf32>
    %99 = vector.broadcast %98 : vector<1x256xf32> to vector<8x256xf32>
    %100 = arith.mulf %97, %99 : vector<8x256xf32>
    %101 = arith.addf %95, %100 : vector<8x256xf32>
    %102 = vector.broadcast %2 : vector<8x1xf32> to vector<8x256xf32>
    %103 = arith.addf %101, %102 : vector<8x256xf32>
    %104 = tpu.iota {dimensions = array<i32: 0>} : vector<8x256xi32>
    %c4_i32 = arith.constant 4 : i32
    %105 = vector.broadcast %c4_i32 : i32 to vector<8x256xi32>
    %106 = arith.cmpi slt, %104, %105 : vector<8x256xi32>
    %107 = math.tanh %103 : vector<8x256xf32>
    %c0_49 = arith.constant 0 : index
    %108 = memref.load %arg7[%c0_49] : memref<1xf32, #tpu.memory_space<smem>>
    %109 = vector.broadcast %108 : f32 to vector<8x256xf32>
    %110 = arith.mulf %107, %109 : vector<8x256xf32>
    %111 = arith.select %106, %110, %103 : vector<8x256xi1>, vector<8x256xf32>
    %c0_50 = arith.constant 0 : index
    %c0_51 = arith.constant 0 : index
    %112 = vector.load %arg8[%c0_50, %c0_51] : memref<8x256xf32, #tpu.memory_space<vmem>>, vector<8x256xf32>
    tpu.vector_store %arg8[%c0_50, %c0_51], %111 {strides = array<i32>} : memref<8x256xf32, #tpu.memory_space<vmem>>, vector<8x256xf32>,
    return
  }
  func.func @transform_0(%arg0: i32) -> (i32, i32) {
    %c0_i32 = arith.constant 0 : i32
    %c0_i32_0 = arith.constant 0 : i32
    return %c0_i32, %arg0 : i32, i32
  }
  func.func @transform_1(%arg0: i32) -> (i32, i32) {
    %c0_i32 = arith.constant 0 : i32
    %c0_i32_0 = arith.constant 0 : i32
    %c0_i32_1 = arith.constant 0 : i32
    return %c0_i32, %c0_i32_0 : i32, i32
  }
  func.func @transform_2(%arg0: i32) -> (i32, i32) {
    %c0_i32 = arith.constant 0 : i32
    %c0_i32_0 = arith.constant 0 : i32
    %c0_i32_1 = arith.constant 0 : i32
    return %c0_i32, %c0_i32_0 : i32, i32
  }
  func.func @transform_3(%arg0: i32) -> (i32, i32) {
    %c0_i32 = arith.constant 0 : i32
    %c0_i32_0 = arith.constant 0 : i32
    %c0_i32_1 = arith.constant 0 : i32
    return %c0_i32, %c0_i32_0 : i32, i32
  }
  func.func @transform_4(%arg0: i32) -> (i32, i32) {
    %c0_i32 = arith.constant 0 : i32
    %c0_i32_0 = arith.constant 0 : i32
    %c0_i32_1 = arith.constant 0 : i32
    return %c0_i32, %c0_i32_0 : i32, i32
  }
  func.func @transform_5(%arg0: i32) -> (i32, i32) {
    %c0_i32 = arith.constant 0 : i32
    %c0_i32_0 = arith.constant 0 : i32
    %c0_i32_1 = arith.constant 0 : i32
    return %c0_i32, %c0_i32_0 : i32, i32
  }
  func.func @transform_6(%arg0: i32) -> i32 {
    %c0_i32 = arith.constant 0 : i32
    %c0_i32_0 = arith.constant 0 : i32
    return %c0_i32 : i32
  }
  func.func @transform_7(%arg0: i32) -> (i32, i32) {
    %c0_i32 = arith.constant 0 : i32
    %c0_i32_0 = arith.constant 0 : i32
    return %c0_i32, %arg0 : i32, i32
  }
}

</mosaic_0001>

<llo_original>
// kernel: concat_net_forward.1
$region0: #{concat_net_forward.1}
  #allocation0 [shape = 'u32[]', space=smem, size = 0x4, offset = 0x4, fixed_abs, tag = 'smem constant byte address 0x4 - core index']
  #allocation1 [shape = 'u32[144,128]{1,0:T(1,128)}', space=vmem, size = 0x12000, scoped, tag = 'internal scratch']
  #allocation2 [shape = 'f32[1]{0:T(128)S(6)}', space=smem, size = 0x200, scoped, tag = 'scoped memory for concat_net_forward.1']
  %s0 = inlined_call_operand.vmem [shape: f32[4,512], index: 0, kind: input, shape index: {}]
  %s1 = inlined_call_operand.vmem [shape: f32[9,256], index: 1, kind: input, shape index: {}]
  %s2 = inlined_call_operand.vmem [shape: f32[64,36], index: 2, kind: input, shape index: {}]
  %s3 = inlined_call_operand.vmem [shape: f32[64,64], index: 3, kind: input, shape index: {}]
  %s4 = inlined_call_operand.vmem [shape: f32[72,64], index: 4, kind: input, shape index: {}]
  %s5 = inlined_call_operand.vmem [shape: f32[136,1], index: 5, kind: input, shape index: {}]
  %s6 = inlined_call_operand.<no memory space> [shape: f32[1], index: 6, kind: input, shape index: {}]
  %s7 = inlined_call_operand.vmem [shape: f32[8,512], index: 7, kind: output, shape index: {}]
  %s8 = sld [smem:[#allocation0]]
  $region61: #{concat_net_forward.1} parent=0
    _
  %s10 = ssub.s32 1, %s8
  %s11 = scalar_select 0, %s10, %s8
  %12 = sst [smem:[#allocation2]] %s6
  loop: start=0, step=1, limit=4
  $region2: #{concat_net_forward.1} parent=0 // loop_pre_header
    _
  $region3: #{concat_net_forward.1} parent=0 // loop_header
    %s14 = sphi 0, %s18
    %p15 = scmp.ge.s32.totalorder %s14, 4
    %s24 = sphi 0, %s26
    %s27 = sphi 0, %s24
    %s28 = sphi 0, %s27
    %s44 = sphi 0, %s28
    %s48 = sphi 0, %s48
    %s50 = sphi 0, %s48
    %s51 = sphi 0, %s50
    %s65 = sphi 0, %s51
    %s69 = sphi 0, %s69
    %s71 = sphi 0, %s69
    %s72 = sphi 0, %s71
    %s86 = sphi 0, %s72
    %s90 = sphi 0, %s90
    %s92 = sphi 0, %s90
    %s93 = sphi 0, %s92
    %s107 = sphi 0, %s93
    %s111 = sphi 0, %s111
    %s113 = sphi 0, %s111
    %s114 = sphi 0, %s113
    %s128 = sphi 0, %s114
    %s132 = sphi 0, %s132
    %s134 = sphi 0, %s132
    %s135 = sphi 0, %s134
    %s149 = sphi 0, %s135
    %s153 = sphi 0, %s153
    %s155 = sphi 0, %s153
    %s156 = sphi 0, %s155
    %s170 = sphi 0, %s156
    %s176 = sphi 0, %s178
    %s179 = sphi 0, %s176
    %s180 = sphi 0, %s179
    %s196 = sphi 0, %s180
  $region4: #{concat_net_forward.1} parent=0 // loop_header_branch
    %17 = sbr.rel (%p15) target = $region8
  $region5: #{concat_net_forward.1} parent=0 // loop_body
    %s19 = ssub.s32 %s14, 1
    %s20 = ssub.s32 %s14, 2
    %s21 = sadd.s32 %s14, 1
    %s22 = ssub.s32 %s14, %s21
    %p23 = scmp.eq.s32.totalorder %s22, 0
    %s25 = sadd.s32 %s24, 1
    %s26 = scalar_select %p23, %s24, %s25
    %p29 = pneg %p23
    %p30 = scmp.eq.s32.totalorder %s14, 1
    %p31 = por %p29, %p30
    %p32 = scmp.ne.s32.totalorder %s24, %s27
    %p33 = scmp.eq.s32.totalorder %s14, 0
    %p34 = por %p32, %p33
    %p35 = scmp.ne.s32.totalorder %s24, %s27
    %p36 = scmp.eq.s32.totalorder %s19, 1
    %p37 = por %p35, %p36
    %p38 = scmp.ne.s32.totalorder %s27, %s28
    %p39 = scmp.eq.s32.totalorder %s19, 0
    %p40 = por %p38, %p39
    %p41 = scmp.ne.s32.totalorder %s27, %s28
    %p42 = scmp.eq.s32.totalorder %s20, 1
    %p43 = por %p41, %p42
    %p45 = scmp.ne.s32.totalorder %s28, %s44
    %p46 = scmp.eq.s32.totalorder %s20, 0
    %p47 = por %p45, %p46
    %s49 = sadd.s32 %s48, 1
    %p52 = scmp.eq.s32.totalorder %s14, 1
    %p53 = scmp.ne.s32.totalorder %s48, %s50
    %p54 = scmp.eq.s32.totalorder %s14, 0
    %p55 = por %p53, %p54
    %p56 = scmp.ne.s32.totalorder %s48, %s50
    %p57 = scmp.eq.s32.totalorder %s19, 1
    %p58 = por %p56, %p57
    %p59 = scmp.ne.s32.totalorder %s50, %s51
    %p60 = scmp.eq.s32.totalorder %s19, 0
    %p61 = por %p59, %p60
    %p62 = scmp.ne.s32.totalorder %s50, %s51
    %p63 = scmp.eq.s32.totalorder %s20, 1
    %p64 = por %p62, %p63
    %p66 = scmp.ne.s32.totalorder %s51, %s65
    %p67 = scmp.eq.s32.totalorder %s20, 0
    %p68 = por %p66, %p67
    %s70 = sadd.s32 %s69, 1
    %p73 = scmp.eq.s32.totalorder %s14, 1
    %p74 = scmp.ne.s32.totalorder %s69, %s71
    %p75 = scmp.eq.s32.totalorder %s14, 0
    %p76 = por %p74, %p75
    %p77 = scmp.ne.s32.totalorder %s69, %s71
    %p78 = scmp.eq.s32.totalorder %s19, 1
    %p79 = por %p77, %p78
    %p80 = scmp.ne.s32.totalorder %s71, %s72
    %p81 = scmp.eq.s32.totalorder %s19, 0
    %p82 = por %p80, %p81
    %p83 = scmp.ne.s32.totalorder %s71, %s72
    %p84 = scmp.eq.s32.totalorder %s20, 1
    %p85 = por %p83, %p84
    %p87 = scmp.ne.s32.totalorder %s72, %s86
    %p88 = scmp.eq.s32.totalorder %s20, 0
    %p89 = por %p87, %p88
    %s91 = sadd.s32 %s90, 1
    %p94 = scmp.eq.s32.totalorder %s14, 1
    %p95 = scmp.ne.s32.totalorder %s90, %s92
    %p96 = scmp.eq.s32.totalorder %s14, 0
    %p97 = por %p95, %p96
    %p98 = scmp.ne.s32.totalorder %s90, %s92
    %p99 = scmp.eq.s32.totalorder %s19, 1
    %p100 = por %p98, %p99
    %p101 = scmp.ne.s32.totalorder %s92, %s93
    %p102 = scmp.eq.s32.totalorder %s19, 0
    %p103 = por %p101, %p102
    %p104 = scmp.ne.s32.totalorder %s92, %s93
    %p105 = scmp.eq.s32.totalorder %s20, 1
    %p106 = por %p104, %p105
    %p108 = scmp.ne.s32.totalorder %s93, %s107
    %p109 = scmp.eq.s32.totalorder %s20, 0
    %p110 = por %p108, %p109
    %s112 = sadd.s32 %s111, 1
    %p115 = scmp.eq.s32.totalorder %s14, 1
    %p116 = scmp.ne.s32.totalorder %s111, %s113
    %p117 = scmp.eq.s32.totalorder %s14, 0
    %p118 = por %p116, %p117
    %p119 = scmp.ne.s32.totalorder %s111, %s113
    %p120 = scmp.eq.s32.totalorder %s19, 1
    %p121 = por %p119, %p120
    %p122 = scmp.ne.s32.totalorder %s113, %s114
    %p123 = scmp.eq.s32.totalorder %s19, 0
    %p124 = por %p122, %p123
    %p125 = scmp.ne.s32.totalorder %s113, %s114
    %p126 = scmp.eq.s32.totalorder %s20, 1
    %p127 = por %p125, %p126
    %p129 = scmp.ne.s32.totalorder %s114, %s128
    %p130 = scmp.eq.s32.totalorder %s20, 0
    %p131 = por %p129, %p130
    %s133 = sadd.s32 %s132, 1
    %p136 = scmp.eq.s32.totalorder %s14, 1
    %p137 = scmp.ne.s32.totalorder %s132, %s134
    %p138 = scmp.eq.s32.totalorder %s14, 0
    %p139 = por %p137, %p138
    %p140 = scmp.ne.s32.totalorder %s132, %s134
    %p141 = scmp.eq.s32.totalorder %s19, 1
    %p142 = por %p140, %p141
    %p143 = scmp.ne.s32.totalorder %s134, %s135
    %p144 = scmp.eq.s32.totalorder %s19, 0
    %p145 = por %p143, %p144
    %p146 = scmp.ne.s32.totalorder %s134, %s135
    %p147 = scmp.eq.s32.totalorder %s20, 1
    %p148 = por %p146, %p147
    %p150 = scmp.ne.s32.totalorder %s135, %s149
    %p151 = scmp.eq.s32.totalorder %s20, 0
    %p152 = por %p150, %p151
    %s154 = sadd.s32 %s153, 1
    %p157 = scmp.eq.s32.totalorder %s14, 1
    %p158 = scmp.ne.s32.totalorder %s153, %s155
    %p159 = scmp.eq.s32.totalorder %s14, 0
    %p160 = por %p158, %p159
    %p161 = scmp.ne.s32.totalorder %s153, %s155
    %p162 = scmp.eq.s32.totalorder %s19, 1
    %p163 = por %p161, %p162
    %p164 = scmp.ne.s32.totalorder %s155, %s156
    %p165 = scmp.eq.s32.totalorder %s19, 0
    %p166 = por %p164, %p165
    %p167 = scmp.ne.s32.totalorder %s155, %s156
    %p168 = scmp.eq.s32.totalorder %s20, 1
    %p169 = por %p167, %p168
    %p171 = scmp.ne.s32.totalorder %s156, %s170
    %p172 = scmp.eq.s32.totalorder %s20, 0
    %p173 = por %p171, %p172
    %s174 = ssub.s32 %s14, %s21
    %p175 = scmp.eq.s32.totalorder %s174, 0
    %s177 = sadd.s32 %s176, 1
    %s178 = scalar_select %p175, %s176, %s177
    %p181 = pneg %p175
    %p182 = scmp.eq.s32.totalorder %s14, 1
    %p183 = por %p181, %p182
    %p184 = scmp.ne.s32.totalorder %s176, %s179
    %p185 = scmp.eq.s32.totalorder %s14, 0
    %p186 = por %p184, %p185
    %p187 = scmp.ne.s32.totalorder %s176, %s179
    %p188 = scmp.eq.s32.totalorder %s19, 1
    %p189 = por %p187, %p188
    %p190 = scmp.ne.s32.totalorder %s179, %s180
    %p191 = scmp.eq.s32.totalorder %s19, 0
    %p192 = por %p190, %p191
    %p193 = scmp.ne.s32.totalorder %s179, %s180
    %p194 = scmp.eq.s32.totalorder %s20, 1
    %p195 = por %p193, %p194
    %p197 = scmp.ne.s32.totalorder %s180, %s196
    %p198 = scmp.eq.s32.totalorder %s20, 0
    %p199 = por %p197, %p198
    %p200 = scmp.le.s32.totalorder 1, %s14
    %p201 = scmp.lt.s32.totalorder %s14, 3
    %p202 = pnand %p200, %p201
    %p203 = pneg %p202
    // Predicated region
    $region9: #{concat_net_forward.1} parent=5 // pred_check
      _
    $region10: #{concat_net_forward.1} parent=5 // pred_check_branch
      %205 = sbr.rel (%p202) target = $region12
    $region11: #{concat_net_forward.1} parent=5 // pred_region
      %s206 = ssub.s32 %s14, 1
      // Predicated region
      $region13: #{concat_net_forward.1} parent=11 // pred_check
        %p207 = pneg %p61
      $region14: #{concat_net_forward.1} parent=11 // pred_check_branch
        %209 = sbr.rel (%p207) target = $region16
      $region15: #{concat_net_forward.1} parent=11 // pred_region
        _
      $region16: #{concat_net_forward.1} parent=11 // pred_fallthru
        _
      // Predicated region
      $region17: #{concat_net_forward.1} parent=11 // pred_check
        %p210 = pneg %p82
      $region18: #{concat_net_forward.1} parent=11 // pred_check_branch
        %212 = sbr.rel (%p210) target = $region20
      $region19: #{concat_net_forward.1} parent=11 // pred_region
        _
      $region20: #{concat_net_forward.1} parent=11 // pred_fallthru
        _
      // Predicated region
      $region21: #{concat_net_forward.1} parent=11 // pred_check
        %p213 = pneg %p103
      $region22: #{concat_net_forward.1} parent=11 // pred_check_branch
        %215 = sbr.rel (%p213) target = $region24
      $region23: #{concat_net_forward.1} parent=11 // pred_region
        _
      $region24: #{concat_net_forward.1} parent=11 // pred_fallthru
        _
      // Predicated region
      $region25: #{concat_net_forward.1} parent=11 // pred_check
        %p216 = pneg %p124
      $region26: #{concat_net_forward.1} parent=11 // pred_check_branch
        %218 = sbr.rel (%p216) target = $region28
      $region27: #{concat_net_forward.1} parent=11 // pred_region
        _
      $region28: #{concat_net_forward.1} parent=11 // pred_fallthru
        _
      // Predicated region
      $region29: #{concat_net_forward.1} parent=11 // pred_check
        %p219 = pneg %p145
      $region30: #{concat_net_forward.1} parent=11 // pred_check_branch
        %221 = sbr.rel (%p219) target = $region32
      $region31: #{concat_net_forward.1} parent=11 // pred_region
        _
      $region32: #{concat_net_forward.1} parent=11 // pred_fallthru
        _
      // Predicated region
      $region33: #{concat_net_forward.1} parent=11 // pred_check
        %p222 = pneg %p166
      $region34: #{concat_net_forward.1} parent=11 // pred_check_branch
        %224 = sbr.rel (%p222) target = $region36
      $region35: #{concat_net_forward.1} parent=11 // pred_region
        _
      $region36: #{concat_net_forward.1} parent=11 // pred_fallthru
        _
    $region12: #{concat_net_forward.1} parent=5 // pred_fallthru
      _
    %p225 = scmp.lt.s32.totalorder %s14, 2
    // Predicated region
    $region37: #{concat_net_forward.1} parent=5 // pred_check
      %p226 = pneg %p225
    $region38: #{concat_net_forward.1} parent=5 // pred_check_branch
      %228 = sbr.rel (%p226) target = $region40
    $region39: #{concat_net_forward.1} parent=5 // pred_region
      // Predicated region
      $region41: #{concat_net_forward.1} parent=39 // pred_check
        %p229 = pneg %p34
      $region42: #{concat_net_forward.1} parent=39 // pred_check_branch
        %231 = sbr.rel (%p229) target = $region44
      $region43: #{concat_net_forward.1} parent=39 // pred_region
        %s232 = smul.u32 2, %s14
        %p233 = scmp.lt.s32.totalorder %s232, 3
        %s234 = scalar_select %p233, %s232, 3
        %s235 = smul.addr %s234, 4
        %s236 = scalar_lea.vmem %s0, %s235
        %s237 = smul.u32 2, %s14
      $region44: #{concat_net_forward.1} parent=39 // pred_fallthru
        _
    $region40: #{concat_net_forward.1} parent=5 // pred_fallthru
      _
    %p238 = scmp.le.s32.totalorder 1, %s14
    %p239 = scmp.lt.s32.totalorder %s14, 3
    %p240 = pnand %p238, %p239
    %p241 = pneg %p240
    // Predicated region
    $region45: #{concat_net_forward.1} parent=5 // pred_check
      _
    $region46: #{concat_net_forward.1} parent=5 // pred_check_branch
      %243 = sbr.rel (%p240) target = $region48
    $region47: #{concat_net_forward.1} parent=5 // pred_region
      %s244 = ssub.s32 %s14, 1
      %s245 = smul.u32 2, %s19
      %p246 = scmp.lt.s32.totalorder %s245, 3
      %s247 = scalar_select %p246, %s245, 3
      %s248 = smul.addr %s247, 4
      %s249 = scalar_lea.vmem %s0, %s248
      %p250 = pneg %p40
      %p251 = pneg %p37
      %p252 = pneg %p61
      %p253 = pneg %p58
      %p254 = pneg %p82
      %p255 = pneg %p79
      %p256 = pneg %p103
      %p257 = pneg %p100
      %p258 = pneg %p124
      %p259 = pneg %p121
      %p260 = pneg %p145
      %p261 = pneg %p142
      %p262 = pneg %p166
      %p263 = pneg %p163
      %p264 = pneg %p192
      %p265 = pneg %p189
      %s266 = smul.u32 2, %s19
      %p267 = scmp.lt.s32.totalorder %s266, 3
      %s268 = scalar_select %p267, %s266, 3
      %s269 = smul.addr %s268, 8
      %s270 = scalar_lea.vmem %s7, %s269
      %s271 = smul.u32 2, %s19
      %p272 = scmp.lt.s32.totalorder %s271, 3
      %s273 = scalar_select %p272, %s271, 3
      %s274 = smul.addr %s273, 4
      %s275 = scalar_lea.vmem %s0, %s274
      %s276 = smul.u32 2, %s19
      %s277 = smul.u32 2, %s19
      %p278 = scmp.lt.s32.totalorder %s277, 3
      %s279 = scalar_select %p278, %s277, 3
      %s280 = smul.addr %s279, 8
      %s281 = scalar_lea.vmem %s7, %s280
      %s282 = smul.u32 2, %s19
      %v283 = vld [vmem:[%s5] sm:$0xff]
      %v284 = vld [vmem:[%s5 + $0x8] sm:$0xff]
      %v285 = vld [vmem:[%s5 + $0x10] sm:$0xff]
      %v286 = vld [vmem:[%s5 + $0x18] sm:$0xff]
      %v287 = vld [vmem:[%s5 + $0x20] sm:$0xff]
      %v288 = vld [vmem:[%s5 + $0x28] sm:$0xff]
      %v289 = vld [vmem:[%s5 + $0x30] sm:$0xff]
      %v290 = vld [vmem:[%s5 + $0x38] sm:$0xff]
      %v291 = vld [vmem:[%s5 + $0x40] sm:$0xff]
      %v292 = vld [vmem:[%s5 + $0x48] sm:$0xff]
      %v293 = vld [vmem:[%s5 + $0x50] sm:$0xff]
      %v294 = vld [vmem:[%s5 + $0x58] sm:$0xff]
      %v295 = vld [vmem:[%s5 + $0x60] sm:$0xff]
      %v296 = vld [vmem:[%s5 + $0x68] sm:$0xff]
      %v297 = vld [vmem:[%s5 + $0x70] sm:$0xff]
      %v298 = vld [vmem:[%s5 + $0x78] sm:$0xff]
      %v299 = vld [vmem:[%s5 + $0x80] sm:$0xff]
      %v300 = vld [vmem:[%s275] sm:$0xff]
      %v302 = vcombine.high %v300, %v300
      %304 = vrot.lane.b32.xlu0 %v300, 17
      %v305 = vpop.permute.xlu0 %304
      %306 = vrot.lane.b32.xlu0 %v302, 17
      %v307 = vpop.permute.xlu0 %306
      %v308 = vlaneseq
      %v309 = vand.u32 %v308, 127
      %vm310 = vcmp.lt.s32.totalorder %v309, 17
      %v311 = vsel %vm310, %v305, %v307
      %v312 = vsel %vm310, %v307, %v305
      %v313 = vld [vmem:[%s1] ss:$8 sm:$0x3]
      %v315 = vlaneseq
      %v316 = vshrl.u32 %v315, 7
      %v317 = vsub.s32 0, %v316
      %v318 = vrot.slane %v313, %v317
      %v319 = vlaneseq
      %v320 = vshrl.u32 %v319, 7
      %v321 = vsub.s32 1, %v320
      %v322 = vrot.slane %v313, %v321
      %v325 = vmul.f32 %v312, %v318
      %v326 = vmul.f32 %v311, %v322
      %327 = vrot.lane.b32.xlu0 %v300, 16
      %v328 = vpop.permute.xlu0 %327
      %329 = vrot.lane.b32.xlu0 %v302, 16
      %v330 = vpop.permute.xlu0 %329
      %vm331 = vcmp.lt.s32.totalorder %v309, 16
      %v332 = vsel %vm331, %v328, %v330
      %v333 = vsel %vm331, %v330, %v328
      %s334 = scalar_lea.vmem %s1, 1
      %v335 = vld [vmem:[%s334] ss:$8 sm:$0x3]
      %v337 = vlaneseq
      %v338 = vshrl.u32 %v337, 7
      %v339 = vsub.s32 0, %v338
      %v340 = vrot.slane %v335, %v339
      %v341 = vlaneseq
      %v342 = vshrl.u32 %v341, 7
      %v343 = vsub.s32 1, %v342
      %v344 = vrot.slane %v335, %v343
      %v347 = vmul.f32 %v333, %v340
      %v348 = vmul.f32 %v332, %v344
      %349 = vrot.lane.b32.xlu0 %v300, 15
      %v350 = vpop.permute.xlu0 %349
      %351 = vrot.lane.b32.xlu0 %v302, 15
      %v352 = vpop.permute.xlu0 %351
      %vm353 = vcmp.lt.s32.totalorder %v309, 15
      %v354 = vsel %vm353, %v350, %v352
      %v355 = vsel %vm353, %v352, %v350
      %s356 = scalar_lea.vmem %s1, 2
      %v357 = vld [vmem:[%s356] ss:$8 sm:$0x3]
      %v359 = vlaneseq
      %v360 = vshrl.u32 %v359, 7
      %v361 = vsub.s32 0, %v360
      %v362 = vrot.slane %v357, %v361
      %v363 = vlaneseq
      %v364 = vshrl.u32 %v363, 7
      %v365 = vsub.s32 1, %v364
      %v366 = vrot.slane %v357, %v365
      %v369 = vmul.f32 %v355, %v362
      %v370 = vmul.f32 %v354, %v366
      %371 = vrot.lane.b32.xlu0 %v300, 1
      %v372 = vpop.permute.xlu0 %371
      %373 = vrot.lane.b32.xlu0 %v302, 1
      %v374 = vpop.permute.xlu0 %373
      %vm375 = vcmp.lt.s32.totalorder %v309, 1
      %v376 = vsel %vm375, %v372, %v374
      %v377 = vsel %vm375, %v374, %v372
      %s378 = scalar_lea.vmem %s1, 3
      %v379 = vld [vmem:[%s378] ss:$8 sm:$0x3]
      %v381 = vlaneseq
      %v382 = vshrl.u32 %v381, 7
      %v383 = vsub.s32 0, %v382
      %v384 = vrot.slane %v379, %v383
      %v385 = vlaneseq
      %v386 = vshrl.u32 %v385, 7
      %v387 = vsub.s32 1, %v386
      %v388 = vrot.slane %v379, %v387
      %v391 = vmul.f32 %v377, %v384
      %v392 = vmul.f32 %v376, %v388
      %393 = vrot.lane.b32.xlu0 %v300, 127
      %v394 = vpop.permute.xlu0 %393
      %395 = vrot.lane.b32.xlu0 %v302, 127
      %v396 = vpop.permute.xlu0 %395
      %vm397 = vcmp.lt.s32.totalorder %v309, 127
      %v398 = vsel %vm397, %v394, %v396
      %v399 = vsel %vm397, %v396, %v394
      %s400 = scalar_lea.vmem %s1, 5
      %v401 = vld [vmem:[%s400] ss:$8 sm:$0x3]
      %v403 = vlaneseq
      %v404 = vshrl.u32 %v403, 7
      %v405 = vsub.s32 0, %v404
      %v406 = vrot.slane %v401, %v405
      %v407 = vlaneseq
      %v408 = vshrl.u32 %v407, 7
      %v409 = vsub.s32 1, %v408
      %v410 = vrot.slane %v401, %v409
      %v413 = vmul.f32 %v398, %v406
      %v414 = vmul.f32 %v399, %v410
      %415 = vrot.lane.b32.xlu0 %v300, 113
      %v416 = vpop.permute.xlu0 %415
      %417 = vrot.lane.b32.xlu0 %v302, 113
      %v418 = vpop.permute.xlu0 %417
      %vm419 = vcmp.lt.s32.totalorder %v309, 113
      %v420 = vsel %vm419, %v416, %v418
      %v421 = vsel %vm419, %v418, %v416
      %s422 = scalar_lea.vmem %s1, 6
      %v423 = vld [vmem:[%s422] ss:$8 sm:$0x3]
      %v425 = vlaneseq
      %v426 = vshrl.u32 %v425, 7
      %v427 = vsub.s32 0, %v426
      %v428 = vrot.slane %v423, %v427
      %v429 = vlaneseq
      %v430 = vshrl.u32 %v429, 7
      %v431 = vsub.s32 1, %v430
      %v432 = vrot.slane %v423, %v431
      %v435 = vmul.f32 %v420, %v428
      %v436 = vmul.f32 %v421, %v432
      %437 = vrot.lane.b32.xlu0 %v300, 112
      %v438 = vpop.permute.xlu0 %437
      %439 = vrot.lane.b32.xlu0 %v302, 112
      %v440 = vpop.permute.xlu0 %439
      %vm441 = vcmp.lt.s32.totalorder %v309, 112
      %v442 = vsel %vm441, %v438, %v440
      %v443 = vsel %vm441, %v440, %v438
      %s444 = scalar_lea.vmem %s1, 7
      %v445 = vld [vmem:[%s444] ss:$8 sm:$0x3]
      %v447 = vlaneseq
      %v448 = vshrl.u32 %v447, 7
      %v449 = vsub.s32 0, %v448
      %v450 = vrot.slane %v445, %v449
      %v451 = vlaneseq
      %v452 = vshrl.u32 %v451, 7
      %v453 = vsub.s32 1, %v452
      %v454 = vrot.slane %v445, %v453
      %v457 = vmul.f32 %v442, %v450
      %v458 = vmul.f32 %v443, %v454
      %459 = vrot.lane.b32.xlu0 %v300, 111
      %v460 = vpop.permute.xlu0 %459
      %461 = vrot.lane.b32.xlu0 %v302, 111
      %v462 = vpop.permute.xlu0 %461
      %vm463 = vcmp.lt.s32.totalorder %v309, 111
      %v464 = vsel %vm463, %v460, %v462
      %v465 = vsel %vm463, %v462, %v460
      %s466 = scalar_lea.vmem %s1, 16
      %v467 = vld [vmem:[%s466] ss:$8 sm:$0x3]
      %v469 = vlaneseq
      %v470 = vshrl.u32 %v469, 7
      %v471 = vsub.s32 0, %v470
      %v472 = vrot.slane %v467, %v471
      %v473 = vlaneseq
      %v474 = vshrl.u32 %v473, 7
      %v475 = vsub.s32 1, %v474
      %v476 = vrot.slane %v467, %v475
      %v479 = vmul.f32 %v464, %v472
      %v480 = vmul.f32 %v465, %v476
      %v483 = vrot.slane %v347, 4
      %v484 = vrot.slane %v348, 4
      %v489 = vrot.slane %v391, 4
      %v490 = vrot.slane %v392, 4
      %v495 = vrot.slane %v413, 4
      %v496 = vrot.slane %v414, 4
      %v501 = vrot.slane %v457, 4
      %v502 = vrot.slane %v458, 4
      %vm505 = vcmask 1043456
      %v506 = vsel %vm505, %v325, %v483
      %v507 = vsel %vm505, %v326, %v484
      %v508 = vsel %vm505, %v369, %v489
      %v509 = vsel %vm505, %v370, %v490
      %v510 = vsel %vm505, %v300, %v495
      %v511 = vsel %vm505, %v302, %v496
      %v512 = vsel %vm505, %v435, %v501
      %v513 = vsel %vm505, %v436, %v502
      %v514 = vld [vmem:[%s2] sm:$0xff]
      %v515 = vld [vmem:[%s2 + $0x8] sm:$0xff]
      %v516 = vld [vmem:[%s2 + $0x10] sm:$0xff]
      %v517 = vld [vmem:[%s2 + $0x18] sm:$0xff]
      %v518 = vld [vmem:[%s2 + $0x20] sm:$0xff]
      %v519 = vld [vmem:[%s2 + $0x28] sm:$0xff]
      %v520 = vld [vmem:[%s2 + $0x30] sm:$0xff]
      %v521 = vld [vmem:[%s2 + $0x38] sm:$0xff]
      %523 = vset.pattern.permute.xlu0 0
      %524 = vperm.xlu0 %523, %v283
      %v525 = vpop.permute.xlu0 %524
      %528 = vset.pattern.permute.xlu0 0
      %529 = vperm.xlu0 %528, %v284
      %v530 = vpop.permute.xlu0 %529
      %533 = vset.pattern.permute.xlu0 0
      %534 = vperm.xlu0 %533, %v285
      %v535 = vpop.permute.xlu0 %534
      %538 = vset.pattern.permute.xlu0 0
      %539 = vperm.xlu0 %538, %v286
      %v540 = vpop.permute.xlu0 %539
      %543 = vset.pattern.permute.xlu0 0
      %544 = vperm.xlu0 %543, %v287
      %v545 = vpop.permute.xlu0 %544
      %548 = vset.pattern.permute.xlu0 0
      %549 = vperm.xlu0 %548, %v288
      %v550 = vpop.permute.xlu0 %549
      %553 = vset.pattern.permute.xlu0 0
      %554 = vperm.xlu0 %553, %v289
      %v555 = vpop.permute.xlu0 %554
      %558 = vset.pattern.permute.xlu0 0
      %559 = vperm.xlu0 %558, %v290
      %v560 = vpop.permute.xlu0 %559
      %vm562 = vcmask 293888
      %v564 = vsel %vm562, %v514, 0
      %v567 = vsel %vm562, %v515, 0
      %v570 = vsel %vm562, %v516, 0
      %v573 = vsel %vm562, %v517, 0
      %v576 = vsel %vm562, %v518, 0
      %v579 = vsel %vm562, %v519, 0
      %v582 = vsel %vm562, %v520, 0
      %v585 = vsel %vm562, %v521, 0
      %v588 = vsel %vm505, %v479, 0
      %v591 = vsel %vm505, %v480, 0
      %593 = vmatprep.subr.mxu0 0.0
      %594 = vmatpush1.msra.mxu0 0.0
      %595 = vmatprep.subr.mxu0 0.0
      %596 = vmatpush1.msra.mxu0 0.0
      %597 = vmatprep.subr.mxu0 0.0
      %598 = vmatpush1.msra.mxu0 0.0
      %599 = vmatprep.subr.mxu0 0.0
      %600 = vmatpush1.msra.mxu0 0.0
      %601 = vmatprep.subr.mxu0 0.0
      %602 = vmatpush1.msra.mxu0 0.0
      %603 = vmatprep.subr.mxu0 0.0
      %604 = vmatpush1.msra.mxu0 0.0
      %605 = vmatprep.subr.mxu0 0.0
      %606 = vmatpush1.msra.mxu0 0.0
      %607 = vmatprep.subr.mxu0 0.0
      %608 = vmatpush1.msra.mxu0 0.0
      %609 = vmatprep.subr.mxu0 0.0
      %610 = vmatpush1.msra.mxu0 0.0
      %611 = vmatprep.subr.mxu0 0.0
      %612 = vmatpush1.msra.mxu0 0.0
      %613 = vmatprep.subr.mxu0 0.0
      %614 = vmatpush1.msra.mxu0 0.0
      %615 = vmatprep.subr.mxu0 %v591
      %616 = vmatpush1.msra.mxu0 %v588
      %617 = vmatprep.subr.mxu0 %v513
      %618 = vmatpush1.msra.mxu0 %v512
      %619 = vmatprep.subr.mxu0 %v511
      %620 = vmatpush1.msra.mxu0 %v510
      %621 = vmatprep.subr.mxu0 %v509
      %622 = vmatpush1.msra.mxu0 %v508
      %623 = vmatprep.subr.mxu0 %v507
      %624 = vmatpush1.msra.mxu0 %v506
      %625 = vmatprep.subr.mxu0 0.0
      %626 = vmatpush2.msra.mxu0 0.0
      %627 = vmatprep.subr.mxu0 0.0
      %628 = vmatpush2.msra.mxu0 0.0
      %629 = vmatprep.subr.mxu0 0.0
      %630 = vmatpush2.msra.mxu0 0.0
      %631 = vmatprep.subr.mxu0 0.0
      %632 = vmatpush2.msra.mxu0 0.0
      %633 = vmatprep.subr.mxu0 0.0
      %634 = vmatpush2.msra.mxu0 0.0
      %635 = vmatprep.subr.mxu0 0.0
      %636 = vmatpush2.msra.mxu0 0.0
      %637 = vmatprep.subr.mxu0 0.0
      %638 = vmatpush2.msra.mxu0 0.0
      %639 = vmatprep.subr.mxu0 0.0
      %640 = vmatpush2.msra.mxu0 0.0
      %641 = vmatprep.subr.mxu0 0.0
      %642 = vmatpush2.msra.mxu0 0.0
      %643 = vmatprep.subr.mxu0 0.0
      %644 = vmatpush2.msra.mxu0 0.0
      %645 = vmatprep.subr.mxu0 0.0
      %646 = vmatpush2.msra.mxu0 0.0
      %647 = vmatprep.subr.mxu0 0.0
      %648 = vmatpush2.msra.mxu0 0.0
      %649 = vmatprep.subr.mxu0 0.0
      %650 = vmatpush2.msra.mxu0 0.0
      %651 = vmatprep.subr.mxu0 0.0
      %652 = vmatpush2.msra.mxu0 0.0
      %653 = vmatprep.subr.mxu0 0.0
      %654 = vmatpush2.msra.mxu0 0.0
      %655 = vmatprep.subr.mxu0 0.0
      %656 = vmatpush2.msra.mxu0 0.0
      %657 = vmatprep.mubr.f32.mxu0 0.0
      %658 = vmatmul.mubr.f32.gmra.mxu0 %v564
      %v659 = vpop.f32.mrf.mxu0
      %v660 = vadd.f32 %v525, %v659
      %v661 = vpop.f32.mrf.mxu0
      %v662 = vadd.f32 %v525, %v661
      %663 = vmatprep.mubr.f32.mxu0 0.0
      %664 = vmatmul.mubr.f32.gmra.mxu0 %v567
      %v665 = vpop.f32.mrf.mxu0
      %v666 = vadd.f32 %v530, %v665
      %v667 = vpop.f32.mrf.mxu0
      %v668 = vadd.f32 %v530, %v667
      %669 = vmatprep.mubr.f32.mxu0 0.0
      %670 = vmatmul.mubr.f32.gmra.mxu0 %v570
      %v671 = vpop.f32.mrf.mxu0
      %v672 = vadd.f32 %v535, %v671
      %v673 = vpop.f32.mrf.mxu0
      %v674 = vadd.f32 %v535, %v673
      %675 = vmatprep.mubr.f32.mxu0 0.0
      %676 = vmatmul.mubr.f32.gmra.mxu0 %v573
      %v677 = vpop.f32.mrf.mxu0
      %v678 = vadd.f32 %v540, %v677
      %v679 = vpop.f32.mrf.mxu0
      %v680 = vadd.f32 %v540, %v679
      %681 = vmatprep.mubr.f32.mxu0 0.0
      %682 = vmatmul.mubr.f32.gmra.mxu0 %v576
      %v683 = vpop.f32.mrf.mxu0
      %v684 = vadd.f32 %v545, %v683
      %v685 = vpop.f32.mrf.mxu0
      %v686 = vadd.f32 %v545, %v685
      %687 = vmatprep.mubr.f32.mxu0 0.0
      %688 = vmatmul.mubr.f32.gmra.mxu0 %v579
      %v689 = vpop.f32.mrf.mxu0
      %v690 = vadd.f32 %v550, %v689
      %v691 = vpop.f32.mrf.mxu0
      %v692 = vadd.f32 %v550, %v691
      %693 = vmatprep.mubr.f32.mxu0 0.0
      %694 = vmatmul.mubr.f32.gmra.mxu0 %v582
      %v695 = vpop.f32.mrf.mxu0
      %v696 = vadd.f32 %v555, %v695
      %v697 = vpop.f32.mrf.mxu0
      %v698 = vadd.f32 %v555, %v697
      %699 = vmatprep.mubr.f32.mxu0 0.0
      %700 = vmatmul.mubr.f32.gmra.mxu0 %v585
      %v701 = vpop.f32.mrf.mxu0
      %v702 = vadd.f32 %v560, %v701
      %v703 = vpop.f32.mrf.mxu0
      %v704 = vadd.f32 %v560, %v703
      %705 = vdwg.mxu0
      %v706 = vmax.f32 %v660, 0.0
      %v707 = vmax.f32 %v662, 0.0
      %v708 = vmax.f32 %v666, 0.0
      %v709 = vmax.f32 %v668, 0.0
      %v710 = vmax.f32 %v672, 0.0
      %v711 = vmax.f32 %v674, 0.0
      %v712 = vmax.f32 %v678, 0.0
      %v713 = vmax.f32 %v680, 0.0
      %v714 = vmax.f32 %v684, 0.0
      %v715 = vmax.f32 %v686, 0.0
      %v716 = vmax.f32 %v690, 0.0
      %v717 = vmax.f32 %v692, 0.0
      %v718 = vmax.f32 %v696, 0.0
      %v719 = vmax.f32 %v698, 0.0
      %v720 = vmax.f32 %v702, 0.0
      %v721 = vmax.f32 %v704, 0.0
      %v722 = vld [vmem:[%s3] sm:$0xff]
      %v723 = vld [vmem:[%s3 + $0x8] sm:$0xff]
      %v724 = vld [vmem:[%s3 + $0x10] sm:$0xff]
      %v725 = vld [vmem:[%s3 + $0x18] sm:$0xff]
      %v726 = vld [vmem:[%s3 + $0x20] sm:$0xff]
      %v727 = vld [vmem:[%s3 + $0x28] sm:$0xff]
      %v728 = vld [vmem:[%s3 + $0x30] sm:$0xff]
      %v729 = vld [vmem:[%s3 + $0x38] sm:$0xff]
      %731 = vset.pattern.permute.xlu0 0
      %732 = vperm.xlu0 %731, %v291
      %v733 = vpop.permute.xlu0 %732
      %736 = vset.pattern.permute.xlu0 0
      %737 = vperm.xlu0 %736, %v292
      %v738 = vpop.permute.xlu0 %737
      %741 = vset.pattern.permute.xlu0 0
      %742 = vperm.xlu0 %741, %v293
      %v743 = vpop.permute.xlu0 %742
      %746 = vset.pattern.permute.xlu0 0
      %747 = vperm.xlu0 %746, %v294
      %v748 = vpop.permute.xlu0 %747
      %751 = vset.pattern.permute.xlu0 0
      %752 = vperm.xlu0 %751, %v295
      %v753 = vpop.permute.xlu0 %752
      %756 = vset.pattern.permute.xlu0 0
      %757 = vperm.xlu0 %756, %v296
      %v758 = vpop.permute.xlu0 %757
      %761 = vset.pattern.permute.xlu0 0
      %762 = vperm.xlu0 %761, %v297
      %v763 = vpop.permute.xlu0 %762
      %766 = vset.pattern.permute.xlu0 0
      %767 = vperm.xlu0 %766, %v298
      %v768 = vpop.permute.xlu0 %767
      %vm770 = vcmask 523264
      %v772 = vsel %vm770, %v722, 0
      %v775 = vsel %vm770, %v723, 0
      %v778 = vsel %vm770, %v724, 0
      %v781 = vsel %vm770, %v725, 0
      %v784 = vsel %vm770, %v726, 0
      %v787 = vsel %vm770, %v727, 0
      %v790 = vsel %vm770, %v728, 0
      %v793 = vsel %vm770, %v729, 0
      %795 = vmatprep.subr.mxu0 0.0
      %796 = vmatpush1.msra.mxu0 0.0
      %797 = vmatprep.subr.mxu0 0.0
      %798 = vmatpush1.msra.mxu0 0.0
      %799 = vmatprep.subr.mxu0 0.0
      %800 = vmatpush1.msra.mxu0 0.0
      %801 = vmatprep.subr.mxu0 0.0
      %802 = vmatpush1.msra.mxu0 0.0
      %803 = vmatprep.subr.mxu0 0.0
      %804 = vmatpush1.msra.mxu0 0.0
      %805 = vmatprep.subr.mxu0 0.0
      %806 = vmatpush1.msra.mxu0 0.0
      %807 = vmatprep.subr.mxu0 0.0
      %808 = vmatpush1.msra.mxu0 0.0
      %809 = vmatprep.subr.mxu0 0.0
      %810 = vmatpush1.msra.mxu0 0.0
      %811 = vmatprep.subr.mxu0 %v721
      %812 = vmatpush1.msra.mxu0 %v720
      %813 = vmatprep.subr.mxu0 %v719
      %814 = vmatpush1.msra.mxu0 %v718
      %815 = vmatprep.subr.mxu0 %v717
      %816 = vmatpush1.msra.mxu0 %v716
      %817 = vmatprep.subr.mxu0 %v715
      %818 = vmatpush1.msra.mxu0 %v714
      %819 = vmatprep.subr.mxu0 %v713
      %820 = vmatpush1.msra.mxu0 %v712
      %821 = vmatprep.subr.mxu0 %v711
      %822 = vmatpush1.msra.mxu0 %v710
      %823 = vmatprep.subr.mxu0 %v709
      %824 = vmatpush1.msra.mxu0 %v708
      %825 = vmatprep.subr.mxu0 %v707
      %826 = vmatpush1.msra.mxu0 %v706
      %827 = vmatprep.subr.mxu0 0.0
      %828 = vmatpush2.msra.mxu0 0.0
      %829 = vmatprep.subr.mxu0 0.0
      %830 = vmatpush2.msra.mxu0 0.0
      %831 = vmatprep.subr.mxu0 0.0
      %832 = vmatpush2.msra.mxu0 0.0
      %833 = vmatprep.subr.mxu0 0.0
      %834 = vmatpush2.msra.mxu0 0.0
      %835 = vmatprep.subr.mxu0 0.0
      %836 = vmatpush2.msra.mxu0 0.0
      %837 = vmatprep.subr.mxu0 0.0
      %838 = vmatpush2.msra.mxu0 0.0
      %839 = vmatprep.subr.mxu0 0.0
      %840 = vmatpush2.msra.mxu0 0.0
      %841 = vmatprep.subr.mxu0 0.0
      %842 = vmatpush2.msra.mxu0 0.0
      %843 = vmatprep.subr.mxu0 0.0
      %844 = vmatpush2.msra.mxu0 0.0
      %845 = vmatprep.subr.mxu0 0.0
      %846 = vmatpush2.msra.mxu0 0.0
      %847 = vmatprep.subr.mxu0 0.0
      %848 = vmatpush2.msra.mxu0 0.0
      %849 = vmatprep.subr.mxu0 0.0
      %850 = vmatpush2.msra.mxu0 0.0
      %851 = vmatprep.subr.mxu0 0.0
      %852 = vmatpush2.msra.mxu0 0.0
      %853 = vmatprep.subr.mxu0 0.0
      %854 = vmatpush2.msra.mxu0 0.0
      %855 = vmatprep.subr.mxu0 0.0
      %856 = vmatpush2.msra.mxu0 0.0
      %857 = vmatprep.subr.mxu0 0.0
      %858 = vmatpush2.msra.mxu0 0.0
      %859 = vmatprep.mubr.f32.mxu0 0.0
      %860 = vmatmul.mubr.f32.gmra.mxu0 %v772
      %v861 = vpop.f32.mrf.mxu0
      %v862 = vadd.f32 %v733, %v861
      %v863 = vpop.f32.mrf.mxu0
      %v864 = vadd.f32 %v733, %v863
      %865 = vmatprep.mubr.f32.mxu0 0.0
      %866 = vmatmul.mubr.f32.gmra.mxu0 %v775
      %v867 = vpop.f32.mrf.mxu0
      %v868 = vadd.f32 %v738, %v867
      %v869 = vpop.f32.mrf.mxu0
      %v870 = vadd.f32 %v738, %v869
      %871 = vmatprep.mubr.f32.mxu0 0.0
      %872 = vmatmul.mubr.f32.gmra.mxu0 %v778
      %v873 = vpop.f32.mrf.mxu0
      %v874 = vadd.f32 %v743, %v873
      %v875 = vpop.f32.mrf.mxu0
      %v876 = vadd.f32 %v743, %v875
      %877 = vmatprep.mubr.f32.mxu0 0.0
      %878 = vmatmul.mubr.f32.gmra.mxu0 %v781
      %v879 = vpop.f32.mrf.mxu0
      %v880 = vadd.f32 %v748, %v879
      %v881 = vpop.f32.mrf.mxu0
      %v882 = vadd.f32 %v748, %v881
      %883 = vmatprep.mubr.f32.mxu0 0.0
      %884 = vmatmul.mubr.f32.gmra.mxu0 %v784
      %v885 = vpop.f32.mrf.mxu0
      %v886 = vadd.f32 %v753, %v885
      %v887 = vpop.f32.mrf.mxu0
      %v888 = vadd.f32 %v753, %v887
      %889 = vmatprep.mubr.f32.mxu0 0.0
      %890 = vmatmul.mubr.f32.gmra.mxu0 %v787
      %v891 = vpop.f32.mrf.mxu0
      %v892 = vadd.f32 %v758, %v891
      %v893 = vpop.f32.mrf.mxu0
      %v894 = vadd.f32 %v758, %v893
      %895 = vmatprep.mubr.f32.mxu0 0.0
      %896 = vmatmul.mubr.f32.gmra.mxu0 %v790
      %v897 = vpop.f32.mrf.mxu0
      %v898 = vadd.f32 %v763, %v897
      %v899 = vpop.f32.mrf.mxu0
      %v900 = vadd.f32 %v763, %v899
      %901 = vmatprep.mubr.f32.mxu0 0.0
      %902 = vmatmul.mubr.f32.gmra.mxu0 %v793
      %v903 = vpop.f32.mrf.mxu0
      %v904 = vadd.f32 %v768, %v903
      %v905 = vpop.f32.mrf.mxu0
      %v906 = vadd.f32 %v768, %v905
      %907 = vdwg.mxu0
      %v908 = vmax.f32 %v862, 0.0
      %v909 = vmax.f32 %v864, 0.0
      %v910 = vmax.f32 %v868, 0.0
      %v911 = vmax.f32 %v870, 0.0
      %v912 = vmax.f32 %v874, 0.0
      %v913 = vmax.f32 %v876, 0.0
      %v914 = vmax.f32 %v880, 0.0
      %v915 = vmax.f32 %v882, 0.0
      %v916 = vmax.f32 %v886, 0.0
      %v917 = vmax.f32 %v888, 0.0
      %v918 = vmax.f32 %v892, 0.0
      %v919 = vmax.f32 %v894, 0.0
      %v920 = vmax.f32 %v898, 0.0
      %v921 = vmax.f32 %v900, 0.0
      %v922 = vmax.f32 %v904, 0.0
      %v923 = vmax.f32 %v906, 0.0
      %v924 = vld [vmem:[%s4] sm:$0xff]
      %v925 = vld [vmem:[%s4 + $0x8] sm:$0xff]
      %v926 = vld [vmem:[%s4 + $0x10] sm:$0xff]
      %v927 = vld [vmem:[%s4 + $0x18] sm:$0xff]
      %v928 = vld [vmem:[%s4 + $0x20] sm:$0xff]
      %v929 = vld [vmem:[%s4 + $0x28] sm:$0xff]
      %v930 = vld [vmem:[%s4 + $0x30] sm:$0xff]
      %v931 = vld [vmem:[%s4 + $0x38] sm:$0xff]
      %v932 = vld [vmem:[%s4 + $0x40] sm:$0xff]
      %v934 = vsel %vm770, %v924, 0
      %v937 = vsel %vm770, %v925, 0
      %v940 = vsel %vm770, %v926, 0
      %v943 = vsel %vm770, %v927, 0
      %v946 = vsel %vm770, %v928, 0
      %v949 = vsel %vm770, %v929, 0
      %v952 = vsel %vm770, %v930, 0
      %v955 = vsel %vm770, %v931, 0
      %v958 = vsel %vm770, %v932, 0
      %960 = vmatprep.subr.mxu0 0.0
      %961 = vmatpush1.msra.mxu0 0.0
      %962 = vmatprep.subr.mxu0 0.0
      %963 = vmatpush1.msra.mxu0 0.0
      %964 = vmatprep.subr.mxu0 0.0
      %965 = vmatpush1.msra.mxu0 0.0
      %966 = vmatprep.subr.mxu0 0.0
      %967 = vmatpush1.msra.mxu0 0.0
      %968 = vmatprep.subr.mxu0 0.0
      %969 = vmatpush1.msra.mxu0 0.0
      %970 = vmatprep.subr.mxu0 0.0
      %971 = vmatpush1.msra.mxu0 0.0
      %972 = vmatprep.subr.mxu0 0.0
      %973 = vmatpush1.msra.mxu0 0.0
      %974 = vmatprep.subr.mxu0 0.0
      %975 = vmatpush1.msra.mxu0 0.0
      %976 = vmatprep.subr.mxu0 %v923
      %977 = vmatpush1.msra.mxu0 %v922
      %978 = vmatprep.subr.mxu0 %v921
      %979 = vmatpush1.msra.mxu0 %v920
      %980 = vmatprep.subr.mxu0 %v919
      %981 = vmatpush1.msra.mxu0 %v918
      %982 = vmatprep.subr.mxu0 %v917
      %983 = vmatpush1.msra.mxu0 %v916
      %984 = vmatprep.subr.mxu0 %v915
      %985 = vmatpush1.msra.mxu0 %v914
      %986 = vmatprep.subr.mxu0 %v913
      %987 = vmatpush1.msra.mxu0 %v912
      %988 = vmatprep.subr.mxu0 %v911
      %989 = vmatpush1.msra.mxu0 %v910
      %990 = vmatprep.subr.mxu0 %v909
      %991 = vmatpush1.msra.mxu0 %v908
      %992 = vmatprep.subr.mxu0 0.0
      %993 = vmatpush2.msra.mxu0 0.0
      %994 = vmatprep.subr.mxu0 0.0
      %995 = vmatpush2.msra.mxu0 0.0
      %996 = vmatprep.subr.mxu0 0.0
      %997 = vmatpush2.msra.mxu0 0.0
      %998 = vmatprep.subr.mxu0 0.0
      %999 = vmatpush2.msra.mxu0 0.0
      %1000 = vmatprep.subr.mxu0 0.0
      %1001 = vmatpush2.msra.mxu0 0.0
      %1002 = vmatprep.subr.mxu0 0.0
      %1003 = vmatpush2.msra.mxu0 0.0
      %1004 = vmatprep.subr.mxu0 0.0
      %1005 = vmatpush2.msra.mxu0 0.0
      %1006 = vmatprep.subr.mxu0 0.0
      %1007 = vmatpush2.msra.mxu0 0.0
      %1008 = vmatprep.subr.mxu0 0.0
      %1009 = vmatpush2.msra.mxu0 0.0
      %1010 = vmatprep.subr.mxu0 0.0
      %1011 = vmatpush2.msra.mxu0 0.0
      %1012 = vmatprep.subr.mxu0 0.0
      %1013 = vmatpush2.msra.mxu0 0.0
      %1014 = vmatprep.subr.mxu0 0.0
      %1015 = vmatpush2.msra.mxu0 0.0
      %1016 = vmatprep.subr.mxu0 0.0
      %1017 = vmatpush2.msra.mxu0 0.0
      %1018 = vmatprep.subr.mxu0 0.0
      %1019 = vmatpush2.msra.mxu0 0.0
      %1020 = vmatprep.subr.mxu0 0.0
      %1021 = vmatpush2.msra.mxu0 0.0
      %1022 = vmatprep.subr.mxu0 0.0
      %1023 = vmatpush2.msra.mxu0 0.0
      %1024 = vmatprep.mubr.f32.mxu0 0.0
      %1025 = vmatmul.mubr.f32.gmra.mxu0 %v934
      %v1026 = vpop.f32.mrf.mxu0
      %v1027 = vadd.f32 0.0, %v1026
      %v1028 = vpop.f32.mrf.mxu0
      %v1029 = vadd.f32 0.0, %v1028
      %1030 = vmatprep.mubr.f32.mxu0 0.0
      %1031 = vmatmul.mubr.f32.gmra.mxu0 %v937
      %v1032 = vpop.f32.mrf.mxu0
      %v1033 = vadd.f32 0.0, %v1032
      %v1034 = vpop.f32.mrf.mxu0
      %v1035 = vadd.f32 0.0, %v1034
      %1036 = vmatprep.mubr.f32.mxu0 0.0
      %1037 = vmatmul.mubr.f32.gmra.mxu0 %v940
      %v1038 = vpop.f32.mrf.mxu0
      %v1039 = vadd.f32 0.0, %v1038
      %v1040 = vpop.f32.mrf.mxu0
      %v1041 = vadd.f32 0.0, %v1040
      %1042 = vmatprep.mubr.f32.mxu0 0.0
      %1043 = vmatmul.mubr.f32.gmra.mxu0 %v943
      %v1044 = vpop.f32.mrf.mxu0
      %v1045 = vadd.f32 0.0, %v1044
      %v1046 = vpop.f32.mrf.mxu0
      %v1047 = vadd.f32 0.0, %v1046
      %1048 = vmatprep.mubr.f32.mxu0 0.0
      %1049 = vmatmul.mubr.f32.gmra.mxu0 %v946
      %v1050 = vpop.f32.mrf.mxu0
      %v1051 = vadd.f32 0.0, %v1050
      %v1052 = vpop.f32.mrf.mxu0
      %v1053 = vadd.f32 0.0, %v1052
      %1054 = vmatprep.mubr.f32.mxu0 0.0
      %1055 = vmatmul.mubr.f32.gmra.mxu0 %v949
      %v1056 = vpop.f32.mrf.mxu0
      %v1057 = vadd.f32 0.0, %v1056
      %v1058 = vpop.f32.mrf.mxu0
      %v1059 = vadd.f32 0.0, %v1058
      %1060 = vmatprep.mubr.f32.mxu0 0.0
      %1061 = vmatmul.mubr.f32.gmra.mxu0 %v952
      %v1062 = vpop.f32.mrf.mxu0
      %v1063 = vadd.f32 0.0, %v1062
      %v1064 = vpop.f32.mrf.mxu0
      %v1065 = vadd.f32 0.0, %v1064
      %1066 = vmatprep.mubr.f32.mxu0 0.0
      %1067 = vmatmul.mubr.f32.gmra.mxu0 %v955
      %v1068 = vpop.f32.mrf.mxu0
      %v1069 = vadd.f32 0.0, %v1068
      %v1070 = vpop.f32.mrf.mxu0
      %v1071 = vadd.f32 0.0, %v1070
      %1072 = vmatprep.mubr.f32.mxu0 0.0
      %1073 = vmatmul.mubr.f32.gmra.mxu0 %v958
      %v1074 = vpop.f32.mrf.mxu0
      %v1075 = vadd.f32 0.0, %v1074
      %v1076 = vpop.f32.mrf.mxu0
      %v1077 = vadd.f32 0.0, %v1076
      %1078 = vdwg.mxu0
      %1079 = vrot.lane.b32.xlu0 %v1027, 17
      %v1080 = vpop.permute.xlu0 %1079
      %1081 = vrot.lane.b32.xlu0 %v1029, 17
      %v1082 = vpop.permute.xlu0 %1081
      %v1083 = vsel %vm310, %v1080, %v1082
      %v1084 = vsel %vm310, %v1082, %v1080
      %v1085 = vmul.f32 %v1084, %v318
      %v1086 = vmul.f32 %v1083, %v322
      %v1087 = vadd.f32 %v1085, 0.0
      %v1088 = vadd.f32 %v1086, 0.0
      %1089 = vrot.lane.b32.xlu0 %v1033, 16
      %v1090 = vpop.permute.xlu0 %1089
      %1091 = vrot.lane.b32.xlu0 %v1035, 16
      %v1092 = vpop.permute.xlu0 %1091
      %v1093 = vsel %vm331, %v1090, %v1092
      %v1094 = vsel %vm331, %v1092, %v1090
      %v1095 = vmul.f32 %v1094, %v340
      %v1096 = vmul.f32 %v1093, %v344
      %v1097 = vadd.f32 %v1087, %v1095
      %v1098 = vadd.f32 %v1088, %v1096
      %1099 = vrot.lane.b32.xlu0 %v1039, 15
      %v1100 = vpop.permute.xlu0 %1099
      %1101 = vrot.lane.b32.xlu0 %v1041, 15
      %v1102 = vpop.permute.xlu0 %1101
      %v1103 = vsel %vm353, %v1100, %v1102
      %v1104 = vsel %vm353, %v1102, %v1100
      %v1105 = vmul.f32 %v1104, %v362
      %v1106 = vmul.f32 %v1103, %v366
      %v1107 = vadd.f32 %v1097, %v1105
      %v1108 = vadd.f32 %v1098, %v1106
      %1109 = vrot.lane.b32.xlu0 %v1045, 1
      %v1110 = vpop.permute.xlu0 %1109
      %1111 = vrot.lane.b32.xlu0 %v1047, 1
      %v1112 = vpop.permute.xlu0 %1111
      %v1113 = vsel %vm375, %v1110, %v1112
      %v1114 = vsel %vm375, %v1112, %v1110
      %v1115 = vmul.f32 %v1114, %v384
      %v1116 = vmul.f32 %v1113, %v388
      %v1117 = vadd.f32 %v1107, %v1115
      %v1118 = vadd.f32 %v1108, %v1116
      %v1119 = vadd.f32 %v1117, %v1051
      %v1120 = vadd.f32 %v1118, %v1053
      %1121 = vrot.lane.b32.xlu0 %v1057, 127
      %v1122 = vpop.permute.xlu0 %1121
      %1123 = vrot.lane.b32.xlu0 %v1059, 127
      %v1124 = vpop.permute.xlu0 %1123
      %v1125 = vsel %vm397, %v1122, %v1124
      %v1126 = vsel %vm397, %v1124, %v1122
      %v1127 = vmul.f32 %v1125, %v406
      %v1128 = vmul.f32 %v1126, %v410
      %v1129 = vadd.f32 %v1119, %v1127
      %v1130 = vadd.f32 %v1120, %v1128
      %1131 = vrot.lane.b32.xlu0 %v1063, 113
      %v1132 = vpop.permute.xlu0 %1131
      %1133 = vrot.lane.b32.xlu0 %v1065, 113
      %v1134 = vpop.permute.xlu0 %1133
      %v1135 = vsel %vm419, %v1132, %v1134
      %v1136 = vsel %vm419, %v1134, %v1132
      %v1137 = vmul.f32 %v1135, %v428
      %v1138 = vmul.f32 %v1136, %v432
      %v1139 = vadd.f32 %v1129, %v1137
      %v1140 = vadd.f32 %v1130, %v1138
      %1141 = vrot.lane.b32.xlu0 %v1069, 112
      %v1142 = vpop.permute.xlu0 %1141
      %1143 = vrot.lane.b32.xlu0 %v1071, 112
      %v1144 = vpop.permute.xlu0 %1143
      %v1145 = vsel %vm441, %v1142, %v1144
      %v1146 = vsel %vm441, %v1144, %v1142
      %v1147 = vmul.f32 %v1145, %v450
      %v1148 = vmul.f32 %v1146, %v454
      %v1149 = vadd.f32 %v1139, %v1147
      %v1150 = vadd.f32 %v1140, %v1148
      %1151 = vrot.lane.b32.xlu0 %v1075, 111
      %v1152 = vpop.permute.xlu0 %1151
      %1153 = vrot.lane.b32.xlu0 %v1077, 111
      %v1154 = vpop.permute.xlu0 %1153
      %v1155 = vsel %vm463, %v1152, %v1154
      %v1156 = vsel %vm463, %v1154, %v1152
      %v1157 = vmul.f32 %v1155, %v472
      %v1158 = vmul.f32 %v1156, %v476
      %v1159 = vadd.f32 %v1149, %v1157
      %v1160 = vadd.f32 %v1150, %v1158
      %1162 = vset.pattern.permute.xlu0 0
      %1163 = vperm.xlu0 %1162, %v299
      %v1164 = vpop.permute.xlu0 %1163
      %v1166 = vadd.f32 %v1159, %v1164
      %v1167 = vadd.f32 %v1160, %v1164
      %v1168 = vlaneseq
      %v1169 = vshrl.u32 %v1168, 7
      %vm1170 = vcmp.lt.s32.totalorder %v1169, 4
      %v1171 = vtanh.pop %v1166
      %v1172 = vtanh.pop %v1167
      %s1173 = sld [smem:[#allocation2]]
      %v1174 = vstv %s1173
      %v1175 = vmul.f32 %v1171, %v1174
      %v1176 = vmul.f32 %v1172, %v1174
      %v1177 = vsel %vm1170, %v1175, %v1166
      %v1178 = vsel %vm1170, %v1176, %v1167
      %1179 = vst [vmem:[%s281] sm:$0xff] %v1177
      %1180 = vst [vmem:[%s281 + $0x8] sm:$0xff] %v1178
      %s1181 = smul.u32 2, %s19
      %p1182 = scmp.lt.s32.totalorder %s1181, 3
      %s1183 = scalar_select %p1182, %s1181, 3
      %s1184 = smul.addr %s1183, 8
      %s1185 = scalar_lea.vmem %s7, %s1184
      // Predicated region
      $region49: #{concat_net_forward.1} parent=47 // pred_check
        %p1186 = pneg %p189
      $region50: #{concat_net_forward.1} parent=47 // pred_check_branch
        %1188 = sbr.rel (%p1186) target = $region52
      $region51: #{concat_net_forward.1} parent=47 // pred_region
        %s1189 = smul.u32 2, %s19
      $region52: #{concat_net_forward.1} parent=47 // pred_fallthru
        _
    $region48: #{concat_net_forward.1} parent=5 // pred_fallthru
      _
    %p1190 = scmp.le.s32.totalorder 2, %s14
    // Predicated region
    $region53: #{concat_net_forward.1} parent=5 // pred_check
      %p1191 = pneg %p1190
    $region54: #{concat_net_forward.1} parent=5 // pred_check_branch
      %1193 = sbr.rel (%p1191) target = $region56
    $region55: #{concat_net_forward.1} parent=5 // pred_region
      %s1194 = ssub.s32 %s14, 2
      // Predicated region
      $region57: #{concat_net_forward.1} parent=55 // pred_check
        %p1195 = pneg %p195
      $region58: #{concat_net_forward.1} parent=55 // pred_check_branch
        %1197 = sbr.rel (%p1195) target = $region60
      $region59: #{concat_net_forward.1} parent=55 // pred_region
        %s1198 = smul.u32 2, %s20
        %p1199 = scmp.lt.s32.totalorder %s1198, 3
        %s1200 = scalar_select %p1199, %s1198, 3
        %s1201 = smul.addr %s1200, 8
        %s1202 = scalar_lea.vmem %s7, %s1201
      $region60: #{concat_net_forward.1} parent=55 // pred_fallthru
        _
    $region56: #{concat_net_forward.1} parent=5 // pred_fallthru
      _
  $region6: #{concat_net_forward.1} parent=0 // loop_footer
    %s18 = sadd.s32 1, %s14
  $region7: #{concat_net_forward.1} parent=0 // loop_footer_branch
    %13 = sbr.rel target = $region3
  $region8: #{concat_net_forward.1} parent=0 // loop_exit
    _

</llo_original>
